<compile_context>
chip_gen: v5e
topology: v5e:2x2
jax: 0.10.0
libtpu: 0.0.40
codegen_flags: <defaults>
</compile_context>

<pallas_src>
import jax
import jax.numpy as jnp
from jax.experimental import pallas as pl
from jax.experimental.pallas import tpu as pltpu


_BUDGET_BYTES = 12 * 1024 * 1024   # target double-buffered in+out VMEM footprint
_LANE_TILE_CAP = 65536             # hard cap on lane tile width (elements)
_MAX_REPS_PER_BLOCK = 32           # cap repeats fused into one output block


def _broadcast_kernel(x_ref, o_ref):
    # Pure replication: every repeat in this output block is a copy of the input tile.
    o_ref[...] = jnp.broadcast_to(x_ref[...], o_ref.shape)


def _sublane_pack(dtype) -> int:
    itemsize = jnp.dtype(dtype).itemsize
    return max(8, 32 // itemsize)   # f32: 8, bf16: 16, int8/fp8: 32


def _round_down_128(n: int) -> int:
    return max(128, (n // 128) * 128)


def _vmem_limit(footprint_bytes: int) -> int:
    # True footprint + headroom for pipelining buffers; clamp to sane range.
    return min(96 << 20, max(16 << 20, int(footprint_bytes * 1.5) + (4 << 20)))


def _add_dim_sublane_dense(x_flat, t_rep, L, pack, itemsize):
    """Preferred path: L % (pack*128) == 0 -> fully (8,128)-dense blocks."""
    Lc = L // pack

    # Lane tile: multiple of 128; keep >= 2-4 lane slabs when the shape allows
    # (megacore split + pipelining), bounded by the VMEM budget and a hard cap.
    if Lc >= 4 * 128:
        target = _round_down_128(Lc // 4)
    elif Lc >= 2 * 128:
        target = _round_down_128(Lc // 2)
    else:
        target = Lc
    budget_max_tl = _BUDGET_BYTES // (2 * 2 * pack * itemsize)   # k = 1 footprint
    tile_l = min(target, _round_down_128(budget_max_tl), _LANE_TILE_CAP, Lc)
    tile_l = max(128, (tile_l // 128) * 128)
    grid_l = pl.cdiv(Lc, tile_l)

    # Repeats per output block: largest divisor of t_rep that fits the budget.
    k = 1
    for cand in range(min(t_rep, _MAX_REPS_PER_BLOCK), 0, -1):
        if t_rep % cand == 0 and 2 * (1 + cand) * pack * tile_l * itemsize <= _BUDGET_BYTES:
            k = cand
            break
    grid_t = t_rep // k

    footprint = 2 * (1 + k) * pack * tile_l * itemsize  # double-buffered in + out

    x3 = x_flat.reshape(1, pack, Lc)                     # free contiguous reshape
    out3 = pl.pallas_call(
        _broadcast_kernel,
        out_shape=jax.ShapeDtypeStruct((t_rep, pack, Lc), x_flat.dtype),
        grid=(grid_l, grid_t),
        in_specs=[
            # Input block index is constant along the trailing repeat axis ->
            # each lane slab is fetched from HBM exactly once.
            pl.BlockSpec((1, pack, tile_l), lambda j, t: (0, 0, j)),
        ],
        out_specs=pl.BlockSpec((k, pack, tile_l), lambda j, t: (t, 0, j)),
        compiler_params=pltpu.CompilerParams(
            dimension_semantics=("parallel", "arbitrary"),
            vmem_limit_bytes=_vmem_limit(footprint),
        ),
        cost_estimate=pl.CostEstimate(
            flops=0, transcendentals=0,
            bytes_accessed=(1 + t_rep) * L * itemsize),
    )(x3)
    return out3.reshape(t_rep, L)


def _add_dim_rowwise(x_flat, t_rep, L, pack, itemsize):
    """Fallback for L not divisible by pack*128: (1, L) -> (t_rep, L)."""
    # Padded VMEM footprint: a (1, tile_l) block occupies `pack` sublanes; the
    # (t_rep, tile_l) output block pads t_rep up to a multiple of `pack`.
    pad_rows_in = pack
    pad_rows_out = pl.cdiv(t_rep, pack) * pack
    per_lane = 2 * (pad_rows_in + pad_rows_out) * itemsize

    if L % 128 == 0:
        tile_l = min(_round_down_128(_BUDGET_BYTES // per_lane), _LANE_TILE_CAP, L)
        tile_l = max(128, (tile_l // 128) * 128)
    else:
        # No 128-aligned tiling without padding copies; a full-dim block is legal.
        tile_l = L
    grid_l = pl.cdiv(L, tile_l)
    footprint = per_lane * tile_l

    out = pl.pallas_call(
        _broadcast_kernel,
        out_shape=jax.ShapeDtypeStruct((t_rep, L), x_flat.dtype),
        grid=(grid_l,),
        in_specs=[pl.BlockSpec((1, tile_l), lambda j: (0, j))],
        out_specs=pl.BlockSpec((t_rep, tile_l), lambda j: (0, j)),
        compiler_params=pltpu.CompilerParams(
            dimension_semantics=("parallel",),
            vmem_limit_bytes=_vmem_limit(footprint),
        ),
        cost_estimate=pl.CostEstimate(
            flops=0, transcendentals=0,
            bytes_accessed=(1 + t_rep) * L * itemsize),
    )(x_flat)
    return out


def add_dim(x: jax.Array, T: float, dt: float) -> jax.Array:
    """Pallas implementation of AddDim.forward.

    x: (N, C, H, W)  ->  (T'*N, 1, C, H, W)  with T' = int(T / dt).
    """
    t_rep = int(T / dt)                      # matches PyTorch float-divide + truncate
    N, C, H, W = x.shape
    out_shape_5d = (t_rep * N, 1, C, H, W)

    if t_rep == 0 or x.size == 0:
        return jnp.zeros(out_shape_5d, x.dtype)

    L = N * C * H * W
    itemsize = jnp.dtype(x.dtype).itemsize
    pack = _sublane_pack(x.dtype)
    x_flat = x.reshape(1, L)                 # free, contiguous, lane-dense flat view

    if L % (pack * 128) == 0:
        out_flat = _add_dim_sublane_dense(x_flat, t_rep, L, pack, itemsize)
    else:
        out_flat = _add_dim_rowwise(x_flat, t_rep, L, pack, itemsize)

    # (T', L) -> (T'*N, 1, C, H, W): row-major contiguous reshape (free).
    return out_flat.reshape(out_shape_5d)


def _reference(x, T, dt):
    t_rep = int(T / dt)
    return jnp.tile(x[:, None, :, :, :], (t_rep, 1, 1, 1, 1))


if __name__ == "__main__":
    key = jax.random.PRNGKey(0)

    # Case 1: shapes implied by the module (NCHW image batch), f32, odd T'=3.
    # L = 2*4*16*16 = 2048 -> sublane-dense path (pack=8, Lc=256, grid_l=2).
    N, C, H, W = 2, 4, 16, 16
    T, dt = 3.0, 1.0
    x = jax.random.normal(key, (N, C, H, W), dtype=jnp.float32)
    out = jax.block_until_ready(add_dim(x, T, dt))
    ref = _reference(x, T, dt)
    t_rep = int(T / dt)
    assert out.shape == (t_rep * N, 1, C, H, W), out.shape
    assert out.dtype == x.dtype
    assert jnp.array_equal(out, ref)

    # Case 2: exercises the row-wise fallback path: L = 2*3*8*48 = 2304
    # (multiple of 128, not of 1024).
    x2 = jax.random.normal(jax.random.PRNGKey(1), (2, 3, 8, 48), dtype=jnp.float32)
    out2 = jax.block_until_ready(add_dim(x2, 4.0, 1.0))
    ref2 = _reference(x2, 4.0, 1.0)
    assert out2.shape == ref2.shape
    assert jnp.array_equal(out2, ref2)

    # Case 3: bf16 (sublane pack 16) with a larger repeat count (grid over T').
    x3 = jax.random.normal(jax.random.PRNGKey(2), (2, 4, 16, 16), dtype=jnp.bfloat16)
    out3 = jax.block_until_ready(add_dim(x3, 0.8, 0.1))   # T' = 8
    ref3 = _reference(x3, 0.8, 0.1)
    assert out3.shape == ref3.shape
    assert out3.dtype == jnp.bfloat16
    assert jnp.array_equal(out3, ref3)

    print("KERNEL_OK")
</pallas_src>

<mosaic_0001>
module attributes {stable_mosaic.version = 11 : i64} {
  func.func @_broadcast_kernel(%arg0: i32, %arg1: i32, %arg2: memref<1x8x128xf32, #tpu.memory_space<vmem>>, %arg3: memref<3x8x128xf32, #tpu.memory_space<vmem>>) attributes {dimension_semantics = [#tpu.dimension_semantics<parallel>, #tpu.dimension_semantics<arbitrary>], iteration_bounds = array<i64: 2, 1>, scalar_prefetch = 0 : i64, scratch_operands = 0 : i64, tpu.core_type = #tpu.core_type<tc>, window_params = [{transform_indices = @transform_0, window_bounds = array<i64: 1, 8, 128>}, {transform_indices = @transform_1, window_bounds = array<i64: 3, 8, 128>}]} {
    %c0 = arith.constant 0 : index
    %c0_0 = arith.constant 0 : index
    %c0_1 = arith.constant 0 : index
    %0 = vector.load %arg2[%c0, %c0_0, %c0_1] : memref<1x8x128xf32, #tpu.memory_space<vmem>>, vector<1x8x128xf32>
    %1 = vector.shape_cast %0 : vector<1x8x128xf32> to vector<1x8x128xf32>
    %2 = vector.broadcast %1 : vector<1x8x128xf32> to vector<3x8x128xf32>
    %c0_2 = arith.constant 0 : index
    %c0_3 = arith.constant 0 : index
    %c0_4 = arith.constant 0 : index
    %3 = vector.load %arg3[%c0_2, %c0_3, %c0_4] : memref<3x8x128xf32, #tpu.memory_space<vmem>>, vector<3x8x128xf32>
    tpu.vector_store %arg3[%c0_2, %c0_3, %c0_4], %2 {strides = array<i32>} : memref<3x8x128xf32, #tpu.memory_space<vmem>>, vector<3x8x128xf32>,
    return
  }
  func.func @transform_0(%arg0: i32, %arg1: i32) -> (i32, i32, i32) {
    %c0_i32 = arith.constant 0 : i32
    %c0_i32_0 = arith.constant 0 : i32
    %c0_i32_1 = arith.constant 0 : i32
    return %c0_i32, %c0_i32_0, %arg0 : i32, i32, i32
  }
  func.func @transform_1(%arg0: i32, %arg1: i32) -> (i32, i32, i32) {
    %c0_i32 = arith.constant 0 : i32
    %c0_i32_0 = arith.constant 0 : i32
    return %arg1, %c0_i32, %arg0 : i32, i32, i32
  }
}

</mosaic_0001>

<llo_original>
// kernel: tpu_custom_call.1
$region0: #{tpu_custom_call.1}
  #allocation0 [shape = 'u32[]', space=smem, size = 0x4, offset = 0x4, fixed_abs, tag = 'smem constant byte address 0x4 - core index']
  #allocation1 [shape = 'u32[72,128]{1,0:T(1,128)}', space=vmem, size = 0x9000, scoped, tag = 'internal scratch']
  %s0 = inlined_call_operand.hbm [shape: f32[1,8,256], index: 0, kind: input, shape index: {}]
  %s1 = inlined_call_operand.hbm [shape: f32[3,8,256], index: 1, kind: output, shape index: {}]
  %s2 = sld [smem:[#allocation0]]
  $region41: #{tpu_custom_call.1} parent=0
    _
  %s4 = ssub.s32 1, %s2
  %s5 = scalar_select 0, %s4, %s2
  $region1: #{tpu_custom_call.1} parent=0
    #allocation2 [shape = 'u8[8192]{0}', space=vmem, size = 0x2000, scoped, tag = 'input window, operand 0']
    #allocation3 [shape = 's32[2]{0}', space=sflag, size = 0x8, scoped, tag = 'scoped memory for tpu_custom_call.1']
    #allocation4 [shape = 's32[2]{0}', space=sflag, size = 0x8, scoped, tag = 'scoped memory for tpu_custom_call.1']
    #allocation5 [shape = 'u8[24576]{0}', space=vmem, size = 0x6000, scoped, tag = 'output window, operand 0']
    %6 = vsyncpa [#allocation3], 0
    %s7 = scalar_lea.sflag [#allocation3], 1
    %8 = vsyncpa %s7, 0
    %9 = vsyncpa [#allocation4], 0
    %s10 = scalar_lea.sflag [#allocation4], 1
    %11 = vsyncpa %s10, 0
    loop: start=0, step=1, limit=4
    $region2: #{tpu_custom_call.1} parent=1 // loop_pre_header
      _
    $region3: #{tpu_custom_call.1} parent=1 // loop_header
      %s13 = sphi 0, %s17
      %p14 = scmp.ge.s32.totalorder %s13, 4
      %s20 = sphi 0, %s32
      %s21 = sphi 0, %s28
      %s22 = sphi 0, %s20
      %s23 = sphi 0, %s21
      %s24 = sphi 0, %s22
      %s25 = sphi 0, %s23
      %s35 = sphi 0, %s37
      %s38 = sphi 0, %s35
      %s39 = sphi 0, %s38
      %s55 = sphi 0, %s39
      %s63 = sphi 0, %s65
      %s66 = sphi 0, %s63
      %s67 = sphi 0, %s66
      %s83 = sphi 0, %s67
    $region4: #{tpu_custom_call.1} parent=1 // loop_header_branch
      %16 = sbr.rel (%p14) target = $region8
    $region5: #{tpu_custom_call.1} parent=1 // loop_body
      %s18 = ssub.s32 %s13, 1
      %s19 = ssub.s32 %s13, 2
      %s26 = sadd.s32 1, %s21
      %p27 = scmp.ge.s32.totalorder %s26, 1
      %s28 = scalar_select %p27, 0, %s26
      %s29 = sadd.s32 1, %s20
      %s30 = scalar_select %p27, %s29, %s20
      %p31 = scmp.ge.s32.totalorder %s30, 2
      %s32 = scalar_select %p31, 0, %s30
      %s33 = ssub.s32 %s20, %s32
      %p34 = scmp.eq.s32.totalorder %s33, 0
      %s36 = sadd.s32 %s35, 1
      %s37 = scalar_select %p34, %s35, %s36
      %p40 = pneg %p34
      %p41 = scmp.eq.s32.totalorder %s13, 1
      %p42 = por %p40, %p41
      %p43 = scmp.ne.s32.totalorder %s35, %s38
      %p44 = scmp.eq.s32.totalorder %s13, 0
      %p45 = por %p43, %p44
      %p46 = scmp.ne.s32.totalorder %s35, %s38
      %p47 = scmp.eq.s32.totalorder %s18, 1
      %p48 = por %p46, %p47
      %p49 = scmp.ne.s32.totalorder %s38, %s39
      %p50 = scmp.eq.s32.totalorder %s18, 0
      %p51 = por %p49, %p50
      %p52 = scmp.ne.s32.totalorder %s38, %s39
      %p53 = scmp.eq.s32.totalorder %s19, 1
      %p54 = por %p52, %p53
      %p56 = scmp.ne.s32.totalorder %s39, %s55
      %p57 = scmp.eq.s32.totalorder %s19, 0
      %p58 = por %p56, %p57
      %s59 = ssub.s32 %s21, %s28
      %s60 = ssub.s32 %s20, %s32
      %s61 = sor.u32 %s59, %s60
      %p62 = scmp.eq.s32.totalorder %s61, 0
      %s64 = sadd.s32 %s63, 1
      %s65 = scalar_select %p62, %s63, %s64
      %p68 = pneg %p62
      %p69 = scmp.eq.s32.totalorder %s13, 1
      %p70 = por %p68, %p69
      %p71 = scmp.ne.s32.totalorder %s63, %s66
      %p72 = scmp.eq.s32.totalorder %s13, 0
      %p73 = por %p71, %p72
      %p74 = scmp.ne.s32.totalorder %s63, %s66
      %p75 = scmp.eq.s32.totalorder %s18, 1
      %p76 = por %p74, %p75
      %p77 = scmp.ne.s32.totalorder %s66, %s67
      %p78 = scmp.eq.s32.totalorder %s18, 0
      %p79 = por %p77, %p78
      %p80 = scmp.ne.s32.totalorder %s66, %s67
      %p81 = scmp.eq.s32.totalorder %s19, 1
      %p82 = por %p80, %p81
      %p84 = scmp.ne.s32.totalorder %s67, %s83
      %p85 = scmp.eq.s32.totalorder %s19, 0
      %p86 = por %p84, %p85
      %p87 = scmp.le.s32.totalorder 1, %s13
      %p88 = scmp.lt.s32.totalorder %s13, 3
      %p89 = pnand %p87, %p88
      %p90 = pneg %p89
      // Predicated region
      $region9: #{tpu_custom_call.1} parent=5 // pred_check
        _
      $region10: #{tpu_custom_call.1} parent=5 // pred_check_branch
        %92 = sbr.rel (%p89) target = $region12
      $region11: #{tpu_custom_call.1} parent=5 // pred_region
        %s93 = ssub.s32 %s13, 1
      $region12: #{tpu_custom_call.1} parent=5 // pred_fallthru
        _
      %p94 = scmp.lt.s32.totalorder %s13, 2
      // Predicated region
      $region13: #{tpu_custom_call.1} parent=5 // pred_check
        %p95 = pneg %p94
      $region14: #{tpu_custom_call.1} parent=5 // pred_check_branch
        %97 = sbr.rel (%p95) target = $region16
      $region15: #{tpu_custom_call.1} parent=5 // pred_region
        // Predicated region
        $region17: #{tpu_custom_call.1} parent=15 // pred_check
          %p98 = pneg %p45
        $region18: #{tpu_custom_call.1} parent=15 // pred_check_branch
          %100 = sbr.rel (%p98) target = $region20
        $region19: #{tpu_custom_call.1} parent=15 // pred_region
          %s101 = sand.u32 %s35, 1
          %s102 = scalar_lea.sflag [#allocation3], %s101
          %s103 = sand.u32 %s35, 1
          %s104 = smul.addr %s103, 8
          %s105 = scalar_lea.vmem [#allocation2], %s104
          %107 = vsyncadd %s102, 0
          %s108 = smul.addr %s20, 8
          %s109 = scalar_lea.hbm %s0, %s108
          %s111 = sshll.u32 %s109, 4
          %s112 = int_to_ptr.hbm [resolvable:$true] %s111
          %s113 = sshll.u32 %s105, 4
          %s114 = int_to_ptr.vmem [resolvable:$true] %s113
          %116 = dma.hbm_to_vmem [thread:$0]  %s112, 128, %s114, %s102
        $region20: #{tpu_custom_call.1} parent=15 // pred_fallthru
          _
      $region16: #{tpu_custom_call.1} parent=5 // pred_fallthru
        _
      %p117 = scmp.le.s32.totalorder 1, %s13
      %p118 = scmp.lt.s32.totalorder %s13, 3
      %p119 = pnand %p117, %p118
      %p120 = pneg %p119
      // Predicated region
      $region21: #{tpu_custom_call.1} parent=5 // pred_check
        _
      $region22: #{tpu_custom_call.1} parent=5 // pred_check_branch
        %122 = sbr.rel (%p119) target = $region24
      $region23: #{tpu_custom_call.1} parent=5 // pred_region
        %s123 = ssub.s32 %s13, 1
        %s124 = sand.u32 %s38, 1
        %s125 = scalar_lea.sflag [#allocation3], %s124
        %s126 = sand.u32 %s38, 1
        %s127 = smul.addr %s126, 8
        %s128 = scalar_lea.vmem [#allocation2], %s127
        // Predicated region
        $region25: #{tpu_custom_call.1} parent=23 // pred_check
          %p129 = pneg %p51
        $region26: #{tpu_custom_call.1} parent=23 // pred_check_branch
          %131 = sbr.rel (%p129) target = $region28
        $region27: #{tpu_custom_call.1} parent=23 // pred_region
          %133 = dma.done %s125, 128
        $region28: #{tpu_custom_call.1} parent=23 // pred_fallthru
          _
        %s134 = sand.u32 %s38, 1
        %s135 = scalar_lea.sflag [#allocation3], %s134
        %s136 = sand.u32 %s38, 1
        %s137 = smul.addr %s136, 8
        %s138 = scalar_lea.vmem [#allocation2], %s137
        %p139 = pneg %p51
        %p140 = pneg %p48
        %p141 = pneg %p79
        %p142 = pneg %p76
        %s143 = sand.u32 %s66, 1
        %s144 = scalar_lea.sflag [#allocation4], %s143
        %s145 = sand.u32 %s66, 1
        %s146 = smul.addr %s145, 24
        %s147 = scalar_lea.vmem [#allocation5], %s146
        %s148 = smul.u32 3, %s23
        %v149 = vld [vmem:[%s128] sm:$0xff]
        %150 = vst [vmem:[%s147] sm:$0xff] %v149
        %151 = vst [vmem:[%s147 + $0x8] sm:$0xff] %v149
        %152 = vst [vmem:[%s147 + $0x10] sm:$0xff] %v149
        %s153 = sand.u32 %s66, 1
        %s154 = scalar_lea.sflag [#allocation4], %s153
        %s155 = sand.u32 %s66, 1
        %s156 = smul.addr %s155, 24
        %s157 = scalar_lea.vmem [#allocation5], %s156
        // Predicated region
        $region29: #{tpu_custom_call.1} parent=23 // pred_check
          %p158 = pneg %p76
        $region30: #{tpu_custom_call.1} parent=23 // pred_check_branch
          %160 = sbr.rel (%p158) target = $region32
        $region31: #{tpu_custom_call.1} parent=23 // pred_region
          %s161 = smul.u32 3, %s23
          %163 = vsyncadd %s154, 0
          %s164 = smul.addr %s161, 2
          %s165 = sadd.s32 %s22, %s164
          %s166 = smul.addr %s165, 8
          %s167 = scalar_lea.hbm %s1, %s166
          %s168 = sshll.u32 %s157, 4
          %s169 = int_to_ptr.vmem [resolvable:$true] %s168
          %s170 = sshll.u32 %s167, 4
          %s171 = int_to_ptr.hbm [resolvable:$true] %s170
          %176 = dma.vmem_to_hbm [thread:$0]  %s169, 384, %s171, %s154, 128, 256, 8
        $region32: #{tpu_custom_call.1} parent=23 // pred_fallthru
          _
      $region24: #{tpu_custom_call.1} parent=5 // pred_fallthru
        _
      %p177 = scmp.le.s32.totalorder 2, %s13
      // Predicated region
      $region33: #{tpu_custom_call.1} parent=5 // pred_check
        %p178 = pneg %p177
      $region34: #{tpu_custom_call.1} parent=5 // pred_check_branch
        %180 = sbr.rel (%p178) target = $region36
      $region35: #{tpu_custom_call.1} parent=5 // pred_region
        %s181 = ssub.s32 %s13, 2
        // Predicated region
        $region37: #{tpu_custom_call.1} parent=35 // pred_check
          %p182 = pneg %p82
        $region38: #{tpu_custom_call.1} parent=35 // pred_check_branch
          %184 = sbr.rel (%p182) target = $region40
        $region39: #{tpu_custom_call.1} parent=35 // pred_region
          %s185 = sand.u32 %s67, 1
          %s186 = scalar_lea.sflag [#allocation4], %s185
          %s187 = sand.u32 %s67, 1
          %s188 = smul.addr %s187, 24
          %s189 = scalar_lea.vmem [#allocation5], %s188
          %191 = dma.done %s186, 384
        $region40: #{tpu_custom_call.1} parent=35 // pred_fallthru
          _
      $region36: #{tpu_custom_call.1} parent=5 // pred_fallthru
        _
    $region6: #{tpu_custom_call.1} parent=1 // loop_footer
      %s17 = sadd.s32 1, %s13
    $region7: #{tpu_custom_call.1} parent=1 // loop_footer_branch
      %12 = sbr.rel target = $region3
    $region8: #{tpu_custom_call.1} parent=1 // loop_exit
      _
    %192 = vsyncpa [#allocation3], 1
    %s193 = scalar_lea.sflag [#allocation3], 1
    %194 = vsyncpa %s193, 1
    %195 = vsyncpa [#allocation4], 1
    %s196 = scalar_lea.sflag [#allocation4], 1
    %197 = vsyncpa %s196, 1

</llo_original>
